<compile_context>
chip_gen: v7x
topology: tpu7x:2x2x1
jax: 0.10.0
libtpu: 0.0.40
codegen_flags: <defaults>
</compile_context>

<pallas_src>
import math

import jax
import jax.numpy as jnp
from jax.experimental import pallas as pl
from jax.experimental.pallas import tpu as pltpu


def _round_up(a, b):
    return (a + b - 1) // b * b


def _linear_logsoftmax_kernel(x_ref, w_ref, b_ref, o_ref, acc_ref):
    """One (batch-tile, k-tile) grid step.

    x_ref:   (TB, TK)     activation tile
    w_ref:   (TK, C_pad)  pre-transposed weight slab (K x N, MXU-natural)
    b_ref:   (1,  C_pad)  bias row (padded classes hold -1e30)
    o_ref:   (TB, C_pad)  log-softmax output tile (lane-dense)
    acc_ref: (TB, C_pad)  f32 logits accumulator, persistent across the K axis
    """
    k = pl.program_id(1)

    @pl.when(k == 0)
    def _init():
        # Fold the bias into the accumulator init (no separate finalize add).
        acc_ref[...] = jnp.zeros_like(acc_ref) + b_ref[...].astype(jnp.float32)

    # MXU matmul on the native (M,K) x (K,N) layout -- no in-kernel transpose.
    acc_ref[...] += jnp.dot(x_ref[...], w_ref[...],
                            preferred_element_type=jnp.float32)

    @pl.when(k == pl.num_programs(1) - 1)
    def _finalize():
        logits = acc_ref[...]
        # log(softmax(z)) == (z - m) - log(sum(exp(z - m)))   (numerically stable)
        m = jnp.max(logits, axis=1, keepdims=True)
        shifted = logits - m
        denom = jnp.sum(jnp.exp(shifted), axis=1, keepdims=True)
        o_ref[...] = (shifted - jnp.log(denom)).astype(o_ref.dtype)


def linear_logsoftmax_classifier(x, weight, bias, *, block_b=None,
                                 use_bf16_matmul=False):
    """Forward pass of LINEAR_LOGSOFTMAX_CLASSIFIER as a Pallas TPU kernel.

    x:      (B, D)  float32
    weight: (C, D)  float32   (PyTorch nn.Linear layout)
    bias:   (C,)    float32
    returns (B, C)  float32   log(softmax(x @ W^T + b, dim=1))
    """
    B, D = x.shape
    C, D2 = weight.shape
    assert D == D2, "input_dim mismatch"
    assert bias.shape == (C,)
    out_dtype = x.dtype

    LANE, SUBLANE = 128, 8
    VMEM_BUDGET = 24 * 1024 * 1024  # stay inside v7x's 32 MiB scoped default

    # --- class padding: lane-dense N dimension -------------------------------
    C_pad = _round_up(C, LANE)

    # --- K (reduction) tiling -------------------------------------------------
    # Keep the whole D in one slab when small, else stream 512-wide K tiles.
    if D * C_pad * 4 <= 8 * 1024 * 1024:
        tk = D
    else:
        tk = 512
    D_pad = _round_up(D, tk)
    n_k = D_pad // tk

    # TODO(synk): add a class-tile grid axis + online (flash-style) log-softmax
    # for vocab-sized heads where even a single (tk, C_pad) slab overflows VMEM.
    assert 2 * tk * C_pad * 4 <= VMEM_BUDGET, (
        "classifier head too large for resident-C kernel; needs C tiling")

    # --- batch tiling: sublane-aligned, bounded by a VMEM budget --------------
    if block_b is None:
        block_b = min(256, _round_up(B, SUBLANE))

        def _vmem_bytes(bb):
            return 4 * (2 * bb * tk        # x tile (double-buffered)
                        + 2 * tk * C_pad   # weight slab (double-buffered)
                        + 2 * C_pad        # bias row
                        + 2 * bb * C_pad   # output tile
                        + bb * C_pad)      # f32 accumulator scratch

        while block_b > SUBLANE and _vmem_bytes(block_b) > VMEM_BUDGET:
            block_b = max(SUBLANE, _round_up(block_b // 2, SUBLANE))
    else:
        block_b = _round_up(block_b, SUBLANE)
    n_b = pl.cdiv(B, block_b)

    # --- wrapper-side layout plumbing (one-off, outside the hot loop) ---------
    #  * pre-transpose weight to (D, C): MXU-natural RHS, no vxpose in-kernel
    #  * pad C to 128 lanes: padded classes get bias -1e30 (never win the max,
    #    exp underflows to 0 in the sum) -> real log-softmax values unaffected
    #  * zero-pad D to a multiple of tk: padded K contributes nothing
    w_t = jnp.transpose(weight)                               # (D, C)
    w_t = jnp.pad(w_t, ((0, D_pad - D), (0, C_pad - C)))
    bias_row = jnp.pad(bias.reshape(1, C), ((0, 0), (0, C_pad - C)),
                       constant_values=-1e30)
    x_pad = jnp.pad(x, ((0, 0), (0, D_pad - D)))

    if use_bf16_matmul:
        # Optional (off by default: slight numerics change vs f32 reference);
        # bf16 operands with f32 accumulate, softmax stays in f32.
        x_pad = x_pad.astype(jnp.bfloat16)
        w_t = w_t.astype(jnp.bfloat16)

    cost = pl.CostEstimate(
        flops=2 * B * C_pad * D_pad,
        transcendentals=B * C_pad + B,
        bytes_accessed=4 * (B * D_pad + n_b * D_pad * C_pad + C_pad + B * C_pad),
    )

    out = pl.pallas_call(
        _linear_logsoftmax_kernel,
        out_shape=jax.ShapeDtypeStruct((B, C_pad), out_dtype),
        grid_spec=pltpu.PrefetchScalarGridSpec(
            num_scalar_prefetch=0,
            grid=(n_b, n_k),                                   # reduction axis last
            in_specs=[
                pl.BlockSpec((block_b, tk), lambda i, k: (i, k)),   # x tile
                pl.BlockSpec((tk, C_pad), lambda i, k: (k, 0)),     # weight slab
                pl.BlockSpec((1, C_pad), lambda i, k: (0, 0)),      # bias row
            ],
            out_specs=pl.BlockSpec((block_b, C_pad), lambda i, k: (i, 0)),
            scratch_shapes=[pltpu.VMEM((block_b, C_pad), jnp.float32)],
        ),
        compiler_params=pltpu.CompilerParams(
            dimension_semantics=("parallel", "arbitrary"),
        ),
        cost_estimate=cost,
    )(x_pad, w_t, bias_row)

    # Drop padded class columns (cheap slice outside the kernel).
    return out[:, :C]


def _xavier_uniform(key, shape, dtype=jnp.float32):
    # matches torch.nn.init.xavier_uniform_ for a Linear weight (C, D)
    fan_out, fan_in = shape
    limit = math.sqrt(6.0 / (fan_in + fan_out))
    return jax.random.uniform(key, shape, dtype, minval=-limit, maxval=limit)


if __name__ == "__main__":
    key = jax.random.PRNGKey(0)
    k_x, k_w = jax.random.split(key)

    B, input_dim, nclass = 8, 32, 16

    x = jax.random.normal(k_x, (B, input_dim), dtype=jnp.float32)
    # deterministic parameter init mirroring _init_weights (xavier_uniform / zeros)
    weight = _xavier_uniform(k_w, (nclass, input_dim))
    bias = jnp.zeros((nclass,), dtype=jnp.float32)

    out = linear_logsoftmax_classifier(x, weight, bias)
    out = jax.block_until_ready(out)

    # reference check in plain JAX
    logits = x @ weight.T + bias
    ref = jax.nn.log_softmax(logits, axis=1)
    assert out.shape == (B, nclass), "shape mismatch"
    assert jnp.allclose(out, ref, atol=1e-5, rtol=1e-5), "mismatch vs reference"

    print("KERNEL_OK")
</pallas_src>

<mosaic_0001>
module attributes {stable_mosaic.version = 11 : i64} {
  func.func @_linear_logsoftmax_kernel(%arg0: i32, %arg1: i32, %arg2: memref<8x32xf32, #tpu.memory_space<vmem>>, %arg3: memref<32x128xf32, #tpu.memory_space<vmem>>, %arg4: memref<1x128xf32, #tpu.memory_space<vmem>>, %arg5: memref<8x128xf32, #tpu.memory_space<vmem>>, %arg6: memref<8x128xf32, #tpu.memory_space<vmem>>) attributes {dimension_semantics = [#tpu.dimension_semantics<parallel>, #tpu.dimension_semantics<arbitrary>], iteration_bounds = array<i64: 1, 1>, scalar_prefetch = 0 : i64, scratch_operands = 1 : i64, tpu.core_type = #tpu.core_type<tc>, window_params = [{transform_indices = @transform_0, window_bounds = array<i64: 8, 32>}, {transform_indices = @transform_1, window_bounds = array<i64: 32, 128>}, {pipeline_mode = #tpu.pipeline_mode<synchronous>, transform_indices = @transform_2, window_bounds = array<i64: 1, 128>}, {transform_indices = @transform_3, window_bounds = array<i64: 8, 128>}]} {
    %c0_i32 = arith.constant 0 : i32
    %0 = arith.cmpi eq, %arg1, %c0_i32 : i32
    %1 = arith.extui %0 : i1 to i32
    %c0_i32_0 = arith.constant 0 : i32
    %2 = arith.cmpi ne, %1, %c0_i32_0 : i32
    scf.if %2 {
      %cst_10 = arith.constant 0.000000e+00 : f32
      %12 = vector.broadcast %cst_10 : f32 to vector<8x128xf32>
      %c0_11 = arith.constant 0 : index
      %c0_12 = arith.constant 0 : index
      %13 = vector.load %arg4[%c0_11, %c0_12] : memref<1x128xf32, #tpu.memory_space<vmem>>, vector<1x128xf32>
      %14 = vector.broadcast %13 : vector<1x128xf32> to vector<8x128xf32>
      %15 = arith.addf %12, %14 : vector<8x128xf32>
      %c0_13 = arith.constant 0 : index
      %c0_14 = arith.constant 0 : index
      %16 = vector.load %arg6[%c0_13, %c0_14] : memref<8x128xf32, #tpu.memory_space<vmem>>, vector<8x128xf32>
      tpu.vector_store %arg6[%c0_13, %c0_14], %15 {strides = array<i32>} : memref<8x128xf32, #tpu.memory_space<vmem>>, vector<8x128xf32>,
    } else {
    }
    %c0 = arith.constant 0 : index
    %c0_1 = arith.constant 0 : index
    %3 = vector.load %arg6[%c0, %c0_1] : memref<8x128xf32, #tpu.memory_space<vmem>>, vector<8x128xf32>
    %c0_2 = arith.constant 0 : index
    %c0_3 = arith.constant 0 : index
    %4 = vector.load %arg2[%c0_2, %c0_3] : memref<8x32xf32, #tpu.memory_space<vmem>>, vector<8x32xf32>
    %c0_4 = arith.constant 0 : index
    %c0_5 = arith.constant 0 : index
    %5 = vector.load %arg3[%c0_4, %c0_5] : memref<32x128xf32, #tpu.memory_space<vmem>>, vector<32x128xf32>
    %cst = arith.constant dense<0.000000e+00> : vector<8x128xf32>
    %6 = tpu.matmul %4, %5, %cst {dimension_numbers = #tpu.dot_dimension_numbers<[1], [0], [0], [1], [0, 0, 1, 1], [], []>} : vector<8x32xf32>, vector<32x128xf32>, vector<8x128xf32> -> vector<8x128xf32>
    %7 = arith.addf %3, %6 : vector<8x128xf32>
    %c0_6 = arith.constant 0 : index
    %c0_7 = arith.constant 0 : index
    %8 = vector.load %arg6[%c0_6, %c0_7] : memref<8x128xf32, #tpu.memory_space<vmem>>, vector<8x128xf32>
    tpu.vector_store %arg6[%c0_6, %c0_7], %7 {strides = array<i32>} : memref<8x128xf32, #tpu.memory_space<vmem>>, vector<8x128xf32>,
    %c0_i32_8 = arith.constant 0 : i32
    %9 = arith.cmpi eq, %arg1, %c0_i32_8 : i32
    %10 = arith.extui %9 : i1 to i32
    %c0_i32_9 = arith.constant 0 : i32
    %11 = arith.cmpi ne, %10, %c0_i32_9 : i32
    scf.if %11 {
      %c0_10 = arith.constant 0 : index
      %c0_11 = arith.constant 0 : index
      %12 = vector.load %arg6[%c0_10, %c0_11] : memref<8x128xf32, #tpu.memory_space<vmem>>, vector<8x128xf32>
      %cst_12 = arith.constant dense<0xFF800000> : vector<8xf32>
      %13 = vector.multi_reduction <maximumf>, %12, %cst_12 [1] : vector<8x128xf32> to vector<8xf32>
      %14 = vector.shape_cast %13 : vector<8xf32> to vector<8x1xf32>
      %15 = vector.broadcast %14 : vector<8x1xf32> to vector<8x128xf32>
      %16 = arith.subf %12, %15 : vector<8x128xf32>
      %17 = math.exp %16 : vector<8x128xf32>
      %cst_13 = arith.constant dense<0.000000e+00> : vector<8xf32>
      %18 = vector.multi_reduction <add>, %17, %cst_13 [1] : vector<8x128xf32> to vector<8xf32>
      %19 = vector.shape_cast %18 : vector<8xf32> to vector<8x1xf32>
      %20 = math.log %19 : vector<8x1xf32>
      %21 = vector.broadcast %20 : vector<8x1xf32> to vector<8x128xf32>
      %22 = arith.subf %16, %21 : vector<8x128xf32>
      %c0_14 = arith.constant 0 : index
      %c0_15 = arith.constant 0 : index
      %23 = vector.load %arg5[%c0_14, %c0_15] : memref<8x128xf32, #tpu.memory_space<vmem>>, vector<8x128xf32>
      tpu.vector_store %arg5[%c0_14, %c0_15], %22 {strides = array<i32>} : memref<8x128xf32, #tpu.memory_space<vmem>>, vector<8x128xf32>,
    } else {
    }
    return
  }
  func.func @transform_0(%arg0: i32, %arg1: i32) -> (i32, i32) {
    %c0_i32 = arith.constant 0 : i32
    return %arg0, %arg1 : i32, i32
  }
  func.func @transform_1(%arg0: i32, %arg1: i32) -> (i32, i32) {
    %c0_i32 = arith.constant 0 : i32
    %c0_i32_0 = arith.constant 0 : i32
    return %arg1, %c0_i32 : i32, i32
  }
  func.func @transform_2(%arg0: i32, %arg1: i32) -> (i32, i32) {
    %c0_i32 = arith.constant 0 : i32
    %c0_i32_0 = arith.constant 0 : i32
    %c0_i32_1 = arith.constant 0 : i32
    return %c0_i32, %c0_i32_0 : i32, i32
  }
  func.func @transform_3(%arg0: i32, %arg1: i32) -> (i32, i32) {
    %c0_i32 = arith.constant 0 : i32
    %c0_i32_0 = arith.constant 0 : i32
    return %arg0, %c0_i32 : i32, i32
  }
}

</mosaic_0001>

<llo_original>
// kernel: tpu_custom_call.1
$region0: #{tpu_custom_call.1}
  #allocation0 [shape = 'u32[]', space=smem, size = 0x4, offset = 0x4, fixed_abs, tag = 'smem constant byte address 0x4 - core index']
  #allocation1 [shape = 'u32[144,128]{1,0:T(1,128)}', space=vmem, size = 0x12000, scoped, tag = 'internal scratch']
  #allocation2 [shape = 'f32[8,128]{1,0:T(8,128)}', space=vmem, size = 0x1000, scoped, tag = 'scratch operand']
  %s0 = inlined_call_operand.hbm [shape: f32[8,32], index: 0, kind: input, shape index: {}]
  %s1 = inlined_call_operand.hbm [shape: f32[32,128], index: 1, kind: input, shape index: {}]
  %s2 = inlined_call_operand.vmem [shape: f32[1,128], index: 2, kind: input, shape index: {}]
  %s3 = inlined_call_operand.hbm [shape: f32[8,128], index: 3, kind: output, shape index: {}]
  %s4 = sld [smem:[#allocation0]]
  $region38: #{tpu_custom_call.1} parent=0
    _
  %s6 = ssub.s32 1, %s4
  %s7 = scalar_select 0, %s6, %s4
  $region1: #{tpu_custom_call.1} parent=0
    #allocation3 [shape = 'u8[4096]{0}', space=vmem, size = 0x1000, scoped, tag = 'input window, operand 0, single buffered']
    #allocation4 [shape = 's32[1]{0}', space=sflag, size = 0x4, scoped, tag = 'scoped memory for tpu_custom_call.1']
    #allocation5 [shape = 's32[1]{0}', space=sflag, size = 0x4, scoped, tag = 'scoped memory for tpu_custom_call.1']
    #allocation6 [shape = 'u8[16384]{0}', space=vmem, size = 0x4000, scoped, tag = 'input window, operand 1, single buffered']
    #allocation7 [shape = 's32[1]{0}', space=sflag, size = 0x4, scoped, tag = 'scoped memory for tpu_custom_call.1']
    #allocation8 [shape = 'u8[4096]{0}', space=vmem, size = 0x1000, scoped, tag = 'output window, operand 0, single buffered']
    %8 = vsyncpa [#allocation4], 0
    %9 = vsyncpa [#allocation7], 0
    %10 = vsyncpa [#allocation5], 0
    // Predicated region
    $region2: #{tpu_custom_call.1} parent=1 // pred_check
      _
    $region3: #{tpu_custom_call.1} parent=1 // pred_check_branch
      %12 = sbr.rel (0) target = $region5
    $region4: #{tpu_custom_call.1} parent=1 // pred_region
      %s14 = ssub.s32 128, 128
      %15 = vsyncadd [#allocation4], %s14
      %s17 = sshll.u32 [#allocation3], 4
      %s18 = int_to_ptr.vmem [resolvable:$true] %s17
      %20 = dma.hbm_to_vmem [thread:$0]  %s0, 128, %s18, [#allocation4]
    $region5: #{tpu_custom_call.1} parent=1 // pred_fallthru
      _
    // Predicated region
    $region6: #{tpu_custom_call.1} parent=1 // pred_check
      _
    $region7: #{tpu_custom_call.1} parent=1 // pred_check_branch
      %22 = sbr.rel (0) target = $region9
    $region8: #{tpu_custom_call.1} parent=1 // pred_region
      %s24 = ssub.s32 512, 512
      %25 = vsyncadd [#allocation7], %s24
      %s26 = sshll.u32 [#allocation6], 4
      %s27 = int_to_ptr.vmem [resolvable:$true] %s26
      %32 = dma.hbm_to_vmem [thread:$0]  %s1, 512, %s27, [#allocation7], 128, 128, 8
    $region9: #{tpu_custom_call.1} parent=1 // pred_fallthru
      _
    // Predicated region
    $region10: #{tpu_custom_call.1} parent=1 // pred_check
      _
    $region11: #{tpu_custom_call.1} parent=1 // pred_check_branch
      %34 = sbr.rel (0) target = $region13
    $region12: #{tpu_custom_call.1} parent=1 // pred_region
      _
    $region13: #{tpu_custom_call.1} parent=1 // pred_fallthru
      _
    // Predicated region
    $region14: #{tpu_custom_call.1} parent=1 // pred_check
      _
    $region15: #{tpu_custom_call.1} parent=1 // pred_check_branch
      %36 = sbr.rel (0) target = $region17
    $region16: #{tpu_custom_call.1} parent=1 // pred_region
      %37 = dma.done [#allocation4], 128
    $region17: #{tpu_custom_call.1} parent=1 // pred_fallthru
      _
    // Predicated region
    $region18: #{tpu_custom_call.1} parent=1 // pred_check
      _
    $region19: #{tpu_custom_call.1} parent=1 // pred_check_branch
      %39 = sbr.rel (0) target = $region21
    $region20: #{tpu_custom_call.1} parent=1 // pred_region
      %40 = dma.done [#allocation7], 512
    $region21: #{tpu_custom_call.1} parent=1 // pred_fallthru
      _
    %p41 = scmp.eq.s32.totalorder 0, 0
    // Predicated region
    $region22: #{tpu_custom_call.1} parent=1 // pred_check
      %p42 = pneg %p41
    $region23: #{tpu_custom_call.1} parent=1 // pred_check_branch
      %44 = sbr.rel (%p42) target = $region25
    $region24: #{tpu_custom_call.1} parent=1 // pred_region
      %v45 = vld [vmem:[%s2] sm:$0x1]
      %v47 = vlaneseq
      %v48 = vshrl.u32 %v47, 7
      %v49 = vsub.s32 0, %v48
      %v50 = vrot.slane %v45, %v49
      %v52 = vadd.f32 %v50, 0.0
      %53 = vst [vmem:[#allocation2] sm:$0xff] %v52
    $region25: #{tpu_custom_call.1} parent=1 // pred_fallthru
      _
    %v54 = vld [vmem:[#allocation2] sm:$0xff]
    %v55 = vld [vmem:[#allocation3] sm:$0xff]
    %v56 = vld [vmem:[#allocation6] sm:$0xff]
    %v57 = vld [vmem:[#allocation6 + $0x8] sm:$0xff]
    %v58 = vld [vmem:[#allocation6 + $0x10] sm:$0xff]
    %v59 = vld [vmem:[#allocation6 + $0x18] sm:$0xff]
    %vm60 = vcmask 261120
    %v62 = vsel %vm60, %v55, 0
    %64 = vmatprep.subr.mxu0 0.0
    %65 = vmatpush1.msra.mxu0 %v56
    %66 = vmatprep.subr.mxu0 0.0
    %67 = vmatpush1.msra.mxu0 %v57
    %68 = vmatprep.subr.mxu0 0.0
    %69 = vmatpush1.msra.mxu0 %v58
    %70 = vmatprep.subr.mxu0 0.0
    %71 = vmatpush1.msra.mxu0 %v59
    %72 = vmatprep.subr.mxu0 0.0
    %73 = vmatpush1.msra.mxu0 0.0
    %74 = vmatprep.subr.mxu0 0.0
    %75 = vmatpush1.msra.mxu0 0.0
    %76 = vmatprep.subr.mxu0 0.0
    %77 = vmatpush1.msra.mxu0 0.0
    %78 = vmatprep.subr.mxu0 0.0
    %79 = vmatpush1.msra.mxu0 0.0
    %80 = vmatprep.subr.mxu0 0.0
    %81 = vmatpush1.msra.mxu0 0.0
    %82 = vmatprep.subr.mxu0 0.0
    %83 = vmatpush1.msra.mxu0 0.0
    %84 = vmatprep.subr.mxu0 0.0
    %85 = vmatpush1.msra.mxu0 0.0
    %86 = vmatprep.subr.mxu0 0.0
    %87 = vmatpush1.msra.mxu0 0.0
    %88 = vmatprep.subr.mxu0 0.0
    %89 = vmatpush1.msra.mxu0 0.0
    %90 = vmatprep.subr.mxu0 0.0
    %91 = vmatpush1.msra.mxu0 0.0
    %92 = vmatprep.subr.mxu0 0.0
    %93 = vmatpush1.msra.mxu0 0.0
    %94 = vmatprep.subr.mxu0 0.0
    %95 = vmatpush1.msra.mxu0 0.0
    %96 = vmatprep.subr.mxu0 0.0
    %97 = vmatpush1.msra.mxu0 0.0
    %98 = vmatprep.subr.mxu0 0.0
    %99 = vmatpush1.msra.mxu0 0.0
    %100 = vmatprep.subr.mxu0 0.0
    %101 = vmatpush1.msra.mxu0 0.0
    %102 = vmatprep.subr.mxu0 0.0
    %103 = vmatpush1.msra.mxu0 0.0
    %104 = vmatprep.subr.mxu0 0.0
    %105 = vmatpush1.msra.mxu0 0.0
    %106 = vmatprep.subr.mxu0 0.0
    %107 = vmatpush1.msra.mxu0 0.0
    %108 = vmatprep.subr.mxu0 0.0
    %109 = vmatpush1.msra.mxu0 0.0
    %110 = vmatprep.subr.mxu0 0.0
    %111 = vmatpush1.msra.mxu0 0.0
    %112 = vmatprep.subr.mxu0 0.0
    %113 = vmatpush1.msra.mxu0 0.0
    %114 = vmatprep.subr.mxu0 0.0
    %115 = vmatpush1.msra.mxu0 0.0
    %116 = vmatprep.subr.mxu0 0.0
    %117 = vmatpush1.msra.mxu0 0.0
    %118 = vmatprep.subr.mxu0 0.0
    %119 = vmatpush1.msra.mxu0 0.0
    %120 = vmatprep.subr.mxu0 0.0
    %121 = vmatpush1.msra.mxu0 0.0
    %122 = vmatprep.subr.mxu0 0.0
    %123 = vmatpush1.msra.mxu0 0.0
    %124 = vmatprep.subr.mxu0 0.0
    %125 = vmatpush1.msra.mxu0 0.0
    %126 = vmatprep.subr.mxu0 0.0
    %127 = vmatpush1.msra.mxu0 0.0
    %128 = vmatprep.mubr.f32.mxu0 0.0
    %129 = vmatmul.mubr.f32.gmra.mrb[0].mxu0 %v62
    %v130 = vpop.f32.mrb[0].mxu0
    %v131 = vadd.f32 0.0, %v130
    %v132 = vpop.f32.mrb[0].mxu0
    %133 = vdwg.mxu0
    %v134 = vadd.f32 %v54, %v131
    %135 = vst [vmem:[#allocation2] sm:$0xff] %v134
    // Predicated region
    $region26: #{tpu_custom_call.1} parent=1 // pred_check
      %p136 = pneg %p41
    $region27: #{tpu_custom_call.1} parent=1 // pred_check_branch
      %138 = sbr.rel (%p136) target = $region29
    $region28: #{tpu_custom_call.1} parent=1 // pred_region
      %v139 = vld [vmem:[#allocation2] sm:$0xff]
      %140 = vmax.xlane.f32.xlu0 %v139
      %v141 = vpop.xlane.xlu0 %140
      %v142 = vsub.f32 %v139, %v141
      %v143 = vmul.f32 %v142, 1.442695
      %v144 = vpow.pop %v143
      %145 = vadd.xlane.f32.xlu0 %v144
      %v146 = vpop.xlane.xlu0 %145
      %v147 = vlog2.pop %v146
      %v148 = vmul.f32 %v147, 0.6931472
      %v149 = vsub.f32 %v142, %v148
      %150 = vst [vmem:[#allocation8] sm:$0xff] %v149
    $region29: #{tpu_custom_call.1} parent=1 // pred_fallthru
      _
    // Predicated region
    $region30: #{tpu_custom_call.1} parent=1 // pred_check
      _
    $region31: #{tpu_custom_call.1} parent=1 // pred_check_branch
      %152 = sbr.rel (0) target = $region33
    $region32: #{tpu_custom_call.1} parent=1 // pred_region
      %s154 = ssub.s32 128, 128
      %155 = vsyncadd [#allocation5], %s154
      %s157 = sshll.u32 [#allocation8], 4
      %s158 = int_to_ptr.vmem [resolvable:$true] %s157
      %160 = dma.vmem_to_hbm [thread:$0]  %s158, 128, %s3, [#allocation5]
    $region33: #{tpu_custom_call.1} parent=1 // pred_fallthru
      _
    // Predicated region
    $region34: #{tpu_custom_call.1} parent=1 // pred_check
      _
    $region35: #{tpu_custom_call.1} parent=1 // pred_check_branch
      %162 = sbr.rel (0) target = $region37
    $region36: #{tpu_custom_call.1} parent=1 // pred_region
      %163 = dma.done [#allocation5], 128
    $region37: #{tpu_custom_call.1} parent=1 // pred_fallthru
      _
    %164 = vsyncpa [#allocation4], 1
    %165 = vsyncpa [#allocation7], 1
    %166 = vsyncpa [#allocation5], 1

</llo_original>
